<compile_context>
chip_gen: v7x
topology: tpu7x:2x2x1
jax: 0.10.0
libtpu: 0.0.40
codegen_flags: <defaults>
</compile_context>

<pallas_src>
import jax
import jax.numpy as jnp
import numpy as np
from jax.experimental import pallas as pl
from jax.experimental.pallas import tpu as pltpu


def _layernorm(x, eps):
    # nn.LayerNorm(hidden, eps, elementwise_affine=False): biased variance over last dim.
    mean = jnp.mean(x, axis=-1, keepdims=True)
    centered = x - mean
    var = jnp.mean(centered * centered, axis=-1, keepdims=True)
    return centered * jax.lax.rsqrt(var + eps)


def final_layer_kernel(
    x_ref,    # (1, tn, 2H)  lane-stacked x tile: [x_r | x_i]
    ms_ref,   # (1, 2, 2H)   row 0 = [shift_r | shift_i], row 1 = [1+scale_r | 1+scale_i]
    w2_ref,   # (2H, Opad)   block-complex weight [[w2_r, w2_i], [-w2_i, w2_r]] (zero-padded)
    b2_ref,   # (1, Opad)    [b2_r - b2_i | b2_r + b2_i] (zero-padded)
    o_ref,    # (1, tn, Opad) [out_r | out_i] lane-dense
):
    H = x_ref.shape[2] // 2
    xt = x_ref[0]                                                    # (tn, 2H)

    # Per-plane LayerNorm on static lane halves, then modulate (broadcast over rows).
    ln = jnp.concatenate(
        [_layernorm(xt[:, :H], 1e-6), _layernorm(xt[:, H:], 1e-6)], axis=1
    )                                                                # (tn, 2H)
    y = ln * ms_ref[0, 1:2, :] + ms_ref[0, 0:1, :]                   # (tn, 2H)

    # Final ComplexLinear as a single block-complex MXU dot.
    o_ref[0] = (
        jnp.dot(y, w2_ref[...], preferred_element_type=jnp.float32) + b2_ref[...]
    )


def final_layer(x, c, params, block_n=512):
    """x: [B, N, H, 2], c: [B, H, 2] -> [B, N, O, 2]."""
    B, N, H, _ = x.shape
    O = params["w2_r"].shape[1]
    Opad = ((2 * O + 127) // 128) * 128            # lane-pad output to 128 multiple

    # N tile: multiple of 8 (or the full extent) so row blocks stay sublane-aligned.
    tn = min(block_n, N)
    if tn < N:
        tn = max(8, (tn // 8) * 8)

    # VMEM budget: x/out/ms double-buffered, W2/bias single-buffered (Buffered(1)).
    def est_vmem(t):
        return 4 * (2 * t * 2 * H + 2 * t * Opad + 2 * H * Opad + 2 * 2 * 2 * H + Opad)

    try:
        vmem_cap = pltpu.get_tpu_info().vmem_capacity_bytes
    except Exception:
        vmem_cap = 128 << 20
    budget = (vmem_cap * 3) // 4                   # ~48 MiB v7x, ~96 MiB v5e/v6e
    while tn > 8 and 2 * est_vmem(tn) > budget:
        tn = max(8, (tn // 2 // 8) * 8)
    vmem_limit = int(min(max(2 * est_vmem(tn), 32 << 20), budget))

    grid = (B, pl.cdiv(N, tn))

    # Lane-stacked plane layout [B, N, 2H] = [real | imag] on lanes.
    # TODO(synk): this concat and the final stack are full HBM round trips; keep the
    # lane-stacked layout across adjacent ops in the surrounding model (or use
    # CompilerParams(allow_input_fusion=...)) to avoid them.
    x2 = jnp.concatenate([x[..., 0], x[..., 1]], axis=-1)            # (B, N, 2H)

    # ---- adaLN_modulation hoisted to the wrapper: O(B*H^2), depends only on b ----
    c_r, c_i = jax.nn.silu(c[..., 0]), jax.nn.silu(c[..., 1])
    mod_r = c_r @ params["w1_r"] - c_i @ params["w1_i"] + (params["b1_r"] - params["b1_i"])
    mod_i = c_i @ params["w1_r"] + c_r @ params["w1_i"] + (params["b1_r"] + params["b1_i"])
    # chunk(2, dim=1): first H = shift, last H = scale (per plane); pre-add the +1.
    shift = jnp.concatenate([mod_r[:, :H], mod_i[:, :H]], axis=-1)           # (B, 2H)
    scale1 = jnp.concatenate([1.0 + mod_r[:, H:], 1.0 + mod_i[:, H:]], axis=-1)
    ms = jnp.stack([shift, scale1], axis=1)                                  # (B, 2, 2H)

    # ---- block-complex final weight: one dot emits [out_r | out_i] ----
    w2blk = jnp.concatenate(
        [jnp.concatenate([params["w2_r"], params["w2_i"]], axis=1),
         jnp.concatenate([-params["w2_i"], params["w2_r"]], axis=1)],
        axis=0,
    )                                                                        # (2H, 2O)
    b2cat = jnp.concatenate(
        [params["b2_r"] - params["b2_i"], params["b2_r"] + params["b2_i"]]
    ).reshape(1, 2 * O)
    if Opad > 2 * O:
        w2blk = jnp.pad(w2blk, ((0, 0), (0, Opad - 2 * O)))
        b2cat = jnp.pad(b2cat, ((0, 0), (0, Opad - 2 * O)))

    flops = grid[0] * grid[1] * (2 * tn * 2 * H * Opad + 8 * tn * 2 * H)
    transcendentals = grid[0] * grid[1] * 2 * tn
    bytes_accessed = 4 * (
        B * N * 2 * H + B * N * Opad + B * 2 * 2 * H + 2 * H * Opad + Opad
    )

    grid_spec = pltpu.PrefetchScalarGridSpec(
        num_scalar_prefetch=0,
        grid=grid,
        in_specs=[
            pl.BlockSpec((1, tn, 2 * H), lambda b, n: (b, n, 0)),        # x planes
            pl.BlockSpec((1, 2, 2 * H), lambda b, n: (b, 0, 0)),         # shift / 1+scale
            pl.BlockSpec((2 * H, Opad), lambda b, n: (0, 0),
                         pipeline_mode=pl.Buffered(1)),                  # block-complex W2
            pl.BlockSpec((1, Opad), lambda b, n: (0, 0),
                         pipeline_mode=pl.Buffered(1)),                  # fused out bias
        ],
        out_specs=pl.BlockSpec((1, tn, Opad), lambda b, n: (b, n, 0)),
    )

    out_wide = pl.pallas_call(
        final_layer_kernel,
        out_shape=jax.ShapeDtypeStruct((B, N, Opad), jnp.float32),
        grid_spec=grid_spec,
        compiler_params=pltpu.CompilerParams(
            dimension_semantics=("parallel", "parallel"),
            vmem_limit_bytes=vmem_limit,
        ),
        cost_estimate=pl.CostEstimate(
            flops=int(flops),
            transcendentals=int(transcendentals),
            bytes_accessed=int(bytes_accessed),
        ),
    )(x2, ms, w2blk, b2cat)

    # Slice off lane padding and restore the module's [..., 2] layout.
    return jnp.stack([out_wide[..., :O], out_wide[..., O:2 * O]], axis=-1)


def final_layer_ref(x, c, p):
    """Pure-JAX reference mirroring the PyTorch module."""
    H = x.shape[2]

    def complex_linear(z_r, z_i, wr, wi, br, bi):
        fr = lambda z: z @ wr + br
        fi = lambda z: z @ wi + bi
        return fr(z_r) - fi(z_i), fr(z_i) + fi(z_r)

    def ln(z):
        m = z.mean(-1, keepdims=True)
        v = ((z - m) ** 2).mean(-1, keepdims=True)
        return (z - m) / jnp.sqrt(v + 1e-6)

    c_r, c_i = jax.nn.silu(c[..., 0]), jax.nn.silu(c[..., 1])
    mod_r, mod_i = complex_linear(c_r, c_i, p["w1_r"], p["w1_i"], p["b1_r"], p["b1_i"])
    shift_r, scale_r = mod_r[:, :H], mod_r[:, H:]
    shift_i, scale_i = mod_i[:, :H], mod_i[:, H:]

    y_r = ln(x[..., 0]) * (1 + scale_r[:, None, :]) + shift_r[:, None, :]
    y_i = ln(x[..., 1]) * (1 + scale_i[:, None, :]) + shift_i[:, None, :]

    out_r, out_i = complex_linear(y_r, y_i, p["w2_r"], p["w2_i"], p["b2_r"], p["b2_i"])
    return jnp.stack([out_r, out_i], axis=-1)


if __name__ == "__main__":
    B, N, H, O = 2, 8, 32, 16  # batch, seq, hidden_dim, out_dim

    key = jax.random.PRNGKey(0)
    keys = jax.random.split(key, 12)

    # Deterministic synthetic parameters (the module's init zeros all Linears, which
    # would make the output identically zero; small random weights exercise the path).
    params = {
        "w1_r": 0.02 * jax.random.normal(keys[0], (H, 2 * H), jnp.float32),
        "w1_i": 0.02 * jax.random.normal(keys[1], (H, 2 * H), jnp.float32),
        "b1_r": 0.01 * jax.random.normal(keys[2], (2 * H,), jnp.float32),
        "b1_i": 0.01 * jax.random.normal(keys[3], (2 * H,), jnp.float32),
        "w2_r": 0.02 * jax.random.normal(keys[4], (H, O), jnp.float32),
        "w2_i": 0.02 * jax.random.normal(keys[5], (H, O), jnp.float32),
        "b2_r": 0.01 * jax.random.normal(keys[6], (O,), jnp.float32),
        "b2_i": 0.01 * jax.random.normal(keys[7], (O,), jnp.float32),
    }

    x = jax.random.normal(keys[8], (B, N, H, 2), jnp.float32)
    c = jax.random.normal(keys[9], (B, H, 2), jnp.float32)

    out = final_layer(x, c, params)
    out = jax.block_until_ready(out)

    ref = final_layer_ref(x, c, params)
    np.testing.assert_allclose(np.asarray(out), np.asarray(ref), rtol=1e-4, atol=1e-5)

    print("KERNEL_OK")
</pallas_src>

<mosaic_0001>
module attributes {stable_mosaic.version = 11 : i64} {
  func.func @final_layer_kernel(%arg0: i32, %arg1: i32, %arg2: memref<1x8x64xf32, #tpu.memory_space<vmem>>, %arg3: memref<1x2x64xf32, #tpu.memory_space<vmem>>, %arg4: memref<64x128xf32, #tpu.memory_space<vmem>>, %arg5: memref<1x128xf32, #tpu.memory_space<vmem>>, %arg6: memref<1x8x128xf32, #tpu.memory_space<vmem>>) attributes {dimension_semantics = [#tpu.dimension_semantics<parallel>, #tpu.dimension_semantics<parallel>], iteration_bounds = array<i64: 2, 1>, scalar_prefetch = 0 : i64, scratch_operands = 0 : i64, tpu.core_type = #tpu.core_type<tc>, window_params = [{transform_indices = @transform_0, window_bounds = array<i64: 1, 8, 64>}, {transform_indices = @transform_1, window_bounds = array<i64: 1, 2, 64>}, {pipeline_mode = #tpu.pipeline_mode<synchronous>, transform_indices = @transform_2, window_bounds = array<i64: 64, 128>}, {pipeline_mode = #tpu.pipeline_mode<synchronous>, transform_indices = @transform_3, window_bounds = array<i64: 1, 128>}, {transform_indices = @transform_4, window_bounds = array<i64: 1, 8, 128>}]} {
    %c0 = arith.constant 0 : index
    %c0_0 = arith.constant 0 : index
    %c0_1 = arith.constant 0 : index
    %0 = vector.load %arg2[%c0, %c0_0, %c0_1] : memref<1x8x64xf32, #tpu.memory_space<vmem>>, vector<1x8x64xf32>
    %1 = vector.shape_cast %0 : vector<1x8x64xf32> to vector<8x64xf32>
    %2 = vector.extract_strided_slice %1 {offsets = [0, 0], sizes = [8, 32], strides = [1, 1]} : vector<8x64xf32> to vector<8x32xf32>
    %cst = arith.constant dense<0.000000e+00> : vector<8xf32>
    %3 = vector.multi_reduction <add>, %2, %cst [1] : vector<8x32xf32> to vector<8xf32>
    %4 = vector.shape_cast %3 : vector<8xf32> to vector<8x1xf32>
    %cst_2 = arith.constant 3.200000e+01 : f32
    %5 = vector.broadcast %cst_2 : f32 to vector<8x1xf32>
    %6 = arith.divf %4, %5 : vector<8x1xf32>
    %7 = vector.broadcast %6 : vector<8x1xf32> to vector<8x32xf32>
    %8 = arith.subf %2, %7 : vector<8x32xf32>
    %9 = arith.mulf %8, %8 : vector<8x32xf32>
    %cst_3 = arith.constant dense<0.000000e+00> : vector<8xf32>
    %10 = vector.multi_reduction <add>, %9, %cst_3 [1] : vector<8x32xf32> to vector<8xf32>
    %11 = vector.shape_cast %10 : vector<8xf32> to vector<8x1xf32>
    %cst_4 = arith.constant 3.200000e+01 : f32
    %12 = vector.broadcast %cst_4 : f32 to vector<8x1xf32>
    %13 = arith.divf %11, %12 : vector<8x1xf32>
    %cst_5 = arith.constant 9.99999997E-7 : f32
    %14 = vector.broadcast %cst_5 : f32 to vector<8x1xf32>
    %15 = arith.addf %13, %14 : vector<8x1xf32>
    %16 = math.rsqrt %15 : vector<8x1xf32>
    %17 = vector.broadcast %16 : vector<8x1xf32> to vector<8x32xf32>
    %18 = arith.mulf %8, %17 : vector<8x32xf32>
    %19 = vector.extract_strided_slice %1 {offsets = [0, 32], sizes = [8, 32], strides = [1, 1]} : vector<8x64xf32> to vector<8x32xf32>
    %cst_6 = arith.constant dense<0.000000e+00> : vector<8xf32>
    %20 = vector.multi_reduction <add>, %19, %cst_6 [1] : vector<8x32xf32> to vector<8xf32>
    %21 = vector.shape_cast %20 : vector<8xf32> to vector<8x1xf32>
    %cst_7 = arith.constant 3.200000e+01 : f32
    %22 = vector.broadcast %cst_7 : f32 to vector<8x1xf32>
    %23 = arith.divf %21, %22 : vector<8x1xf32>
    %24 = vector.broadcast %23 : vector<8x1xf32> to vector<8x32xf32>
    %25 = arith.subf %19, %24 : vector<8x32xf32>
    %26 = arith.mulf %25, %25 : vector<8x32xf32>
    %cst_8 = arith.constant dense<0.000000e+00> : vector<8xf32>
    %27 = vector.multi_reduction <add>, %26, %cst_8 [1] : vector<8x32xf32> to vector<8xf32>
    %28 = vector.shape_cast %27 : vector<8xf32> to vector<8x1xf32>
    %cst_9 = arith.constant 3.200000e+01 : f32
    %29 = vector.broadcast %cst_9 : f32 to vector<8x1xf32>
    %30 = arith.divf %28, %29 : vector<8x1xf32>
    %cst_10 = arith.constant 9.99999997E-7 : f32
    %31 = vector.broadcast %cst_10 : f32 to vector<8x1xf32>
    %32 = arith.addf %30, %31 : vector<8x1xf32>
    %33 = math.rsqrt %32 : vector<8x1xf32>
    %34 = vector.broadcast %33 : vector<8x1xf32> to vector<8x32xf32>
    %35 = arith.mulf %25, %34 : vector<8x32xf32>
    %36 = tpu.concatenate %18, %35 in 1 : vector<8x32xf32>, vector<8x32xf32> -> vector<8x64xf32>
    %c0_11 = arith.constant 0 : index
    %c1 = arith.constant 1 : index
    %c0_12 = arith.constant 0 : index
    %37 = vector.load %arg3[%c0_11, %c1, %c0_12] : memref<1x2x64xf32, #tpu.memory_space<vmem>>, vector<1x1x64xf32>
    %38 = vector.shape_cast %37 : vector<1x1x64xf32> to vector<1x64xf32>
    %39 = vector.broadcast %38 : vector<1x64xf32> to vector<8x64xf32>
    %40 = arith.mulf %36, %39 : vector<8x64xf32>
    %c0_13 = arith.constant 0 : index
    %c0_14 = arith.constant 0 : index
    %c0_15 = arith.constant 0 : index
    %41 = vector.load %arg3[%c0_13, %c0_14, %c0_15] : memref<1x2x64xf32, #tpu.memory_space<vmem>>, vector<1x1x64xf32>
    %42 = vector.shape_cast %41 : vector<1x1x64xf32> to vector<1x64xf32>
    %43 = vector.broadcast %42 : vector<1x64xf32> to vector<8x64xf32>
    %44 = arith.addf %40, %43 : vector<8x64xf32>
    %c0_16 = arith.constant 0 : index
    %c0_17 = arith.constant 0 : index
    %45 = vector.load %arg4[%c0_16, %c0_17] : memref<64x128xf32, #tpu.memory_space<vmem>>, vector<64x128xf32>
    %cst_18 = arith.constant dense<0.000000e+00> : vector<8x128xf32>
    %46 = tpu.matmul %44, %45, %cst_18 {dimension_numbers = #tpu.dot_dimension_numbers<[1], [0], [0], [1], [0, 0, 1, 1], [], []>} : vector<8x64xf32>, vector<64x128xf32>, vector<8x128xf32> -> vector<8x128xf32>
    %c0_19 = arith.constant 0 : index
    %c0_20 = arith.constant 0 : index
    %47 = vector.load %arg5[%c0_19, %c0_20] : memref<1x128xf32, #tpu.memory_space<vmem>>, vector<1x128xf32>
    %48 = vector.broadcast %47 : vector<1x128xf32> to vector<8x128xf32>
    %49 = arith.addf %46, %48 : vector<8x128xf32>
    %c0_21 = arith.constant 0 : index
    %c0_22 = arith.constant 0 : index
    %c0_23 = arith.constant 0 : index
    %50 = vector.load %arg6[%c0_21, %c0_22, %c0_23] : memref<1x8x128xf32, #tpu.memory_space<vmem>>, vector<1x8x128xf32>
    %51 = vector.shape_cast %50 : vector<1x8x128xf32> to vector<8x128xf32>
    %52 = vector.shape_cast %49 : vector<8x128xf32> to vector<1x8x128xf32>
    tpu.vector_store %arg6[%c0_21, %c0_22, %c0_23], %52 {strides = array<i32>} : memref<1x8x128xf32, #tpu.memory_space<vmem>>, vector<1x8x128xf32>,
    return
  }
  func.func @transform_0(%arg0: i32, %arg1: i32) -> (i32, i32, i32) {
    %c0_i32 = arith.constant 0 : i32
    %c0_i32_0 = arith.constant 0 : i32
    return %arg0, %arg1, %c0_i32 : i32, i32, i32
  }
  func.func @transform_1(%arg0: i32, %arg1: i32) -> (i32, i32, i32) {
    %c0_i32 = arith.constant 0 : i32
    %c0_i32_0 = arith.constant 0 : i32
    %c0_i32_1 = arith.constant 0 : i32
    return %arg0, %c0_i32, %c0_i32_0 : i32, i32, i32
  }
  func.func @transform_2(%arg0: i32, %arg1: i32) -> (i32, i32) {
    %c0_i32 = arith.constant 0 : i32
    %c0_i32_0 = arith.constant 0 : i32
    %c0_i32_1 = arith.constant 0 : i32
    return %c0_i32, %c0_i32_0 : i32, i32
  }
  func.func @transform_3(%arg0: i32, %arg1: i32) -> (i32, i32) {
    %c0_i32 = arith.constant 0 : i32
    %c0_i32_0 = arith.constant 0 : i32
    %c0_i32_1 = arith.constant 0 : i32
    return %c0_i32, %c0_i32_0 : i32, i32
  }
  func.func @transform_4(%arg0: i32, %arg1: i32) -> (i32, i32, i32) {
    %c0_i32 = arith.constant 0 : i32
    %c0_i32_0 = arith.constant 0 : i32
    return %arg0, %arg1, %c0_i32 : i32, i32, i32
  }
}

</mosaic_0001>

<llo_original>
// kernel: tpu_custom_call.1
$region0: #{tpu_custom_call.1}
  #allocation0 [shape = 'u32[]', space=smem, size = 0x4, offset = 0x4, fixed_abs, tag = 'smem constant byte address 0x4 - core index']
  #allocation1 [shape = 'u32[144,128]{1,0:T(1,128)}', space=vmem, size = 0x12000, scoped, tag = 'internal scratch']
  %s0 = inlined_call_operand.hbm [shape: f32[2,8,64], index: 0, kind: input, shape index: {}]
  %s1 = inlined_call_operand.hbm [shape: f32[2,2,64], index: 1, kind: input, shape index: {}]
  %s2 = inlined_call_operand.hbm [shape: f32[64,128], index: 2, kind: input, shape index: {}]
  %s3 = inlined_call_operand.vmem [shape: f32[1,128], index: 3, kind: input, shape index: {}]
  %s4 = inlined_call_operand.hbm [shape: f32[2,8,128], index: 4, kind: output, shape index: {}]
  %s5 = sld [smem:[#allocation0]]
  $region61: #{tpu_custom_call.1} parent=0
    _
  %s7 = ssub.s32 1, %s5
  %s8 = scalar_select 0, %s7, %s5
  $region1: #{tpu_custom_call.1} parent=0
    #allocation2 [shape = 'u8[8192]{0}', space=vmem, size = 0x2000, scoped, tag = 'input window, operand 0']
    #allocation3 [shape = 's32[2]{0}', space=sflag, size = 0x8, scoped, tag = 'scoped memory for tpu_custom_call.1']
    #allocation4 [shape = 's32[2]{0}', space=sflag, size = 0x8, scoped, tag = 'scoped memory for tpu_custom_call.1']
    #allocation5 [shape = 'u8[2048]{0}', space=vmem, size = 0x800, scoped, tag = 'input window, operand 1']
    #allocation6 [shape = 's32[2]{0}', space=sflag, size = 0x8, scoped, tag = 'scoped memory for tpu_custom_call.1']
    #allocation7 [shape = 'u8[32768]{0}', space=vmem, size = 0x8000, scoped, tag = 'input window, operand 2, single buffered']
    #allocation8 [shape = 'u8[8192]{0}', space=vmem, size = 0x2000, scoped, tag = 'output window, operand 0']
    %9 = vsyncpa [#allocation3], 0
    %s10 = scalar_lea.sflag [#allocation3], 1
    %11 = vsyncpa %s10, 0
    %12 = vsyncpa [#allocation6], 0
    %s13 = scalar_lea.sflag [#allocation6], 1
    %14 = vsyncpa %s13, 0
    %15 = vsyncpa [#allocation4], 0
    %s16 = scalar_lea.sflag [#allocation4], 1
    %17 = vsyncpa %s16, 0
    loop: start=0, step=1, limit=4
    $region2: #{tpu_custom_call.1} parent=1 // loop_pre_header
      _
    $region3: #{tpu_custom_call.1} parent=1 // loop_header
      %s19 = sphi 0, %s23
      %p20 = scmp.ge.s32.totalorder %s19, 4
      %s26 = sphi 0, %s38
      %s27 = sphi 0, %s34
      %s28 = sphi 0, %s26
      %s29 = sphi 0, %s27
      %s30 = sphi 0, %s28
      %s31 = sphi 0, %s29
      %s43 = sphi 0, %s45
      %s46 = sphi 0, %s43
      %s47 = sphi 0, %s46
      %s63 = sphi 0, %s47
      %s69 = sphi 0, %s71
      %s72 = sphi 0, %s69
      %s73 = sphi 0, %s72
      %s89 = sphi 0, %s73
      %s93 = sphi 0, %s93
      %s95 = sphi 0, %s93
      %s96 = sphi 0, %s95
      %s110 = sphi 0, %s96
      %s114 = sphi 0, %s114
      %s116 = sphi 0, %s114
      %s117 = sphi 0, %s116
      %s131 = sphi 0, %s117
      %s139 = sphi 0, %s141
      %s142 = sphi 0, %s139
      %s143 = sphi 0, %s142
      %s159 = sphi 0, %s143
    $region4: #{tpu_custom_call.1} parent=1 // loop_header_branch
      %22 = sbr.rel (%p20) target = $region8
    $region5: #{tpu_custom_call.1} parent=1 // loop_body
      %s24 = ssub.s32 %s19, 1
      %s25 = ssub.s32 %s19, 2
      %s32 = sadd.s32 1, %s27
      %p33 = scmp.ge.s32.totalorder %s32, 1
      %s34 = scalar_select %p33, 0, %s32
      %s35 = sadd.s32 1, %s26
      %s36 = scalar_select %p33, %s35, %s26
      %p37 = scmp.ge.s32.totalorder %s36, 2
      %s38 = scalar_select %p37, 0, %s36
      %s39 = ssub.s32 %s26, %s38
      %s40 = ssub.s32 %s27, %s34
      %s41 = sor.u32 %s39, %s40
      %p42 = scmp.eq.s32.totalorder %s41, 0
      %s44 = sadd.s32 %s43, 1
      %s45 = scalar_select %p42, %s43, %s44
      %p48 = pneg %p42
      %p49 = scmp.eq.s32.totalorder %s19, 1
      %p50 = por %p48, %p49
      %p51 = scmp.ne.s32.totalorder %s43, %s46
      %p52 = scmp.eq.s32.totalorder %s19, 0
      %p53 = por %p51, %p52
      %p54 = scmp.ne.s32.totalorder %s43, %s46
      %p55 = scmp.eq.s32.totalorder %s24, 1
      %p56 = por %p54, %p55
      %p57 = scmp.ne.s32.totalorder %s46, %s47
      %p58 = scmp.eq.s32.totalorder %s24, 0
      %p59 = por %p57, %p58
      %p60 = scmp.ne.s32.totalorder %s46, %s47
      %p61 = scmp.eq.s32.totalorder %s25, 1
      %p62 = por %p60, %p61
      %p64 = scmp.ne.s32.totalorder %s47, %s63
      %p65 = scmp.eq.s32.totalorder %s25, 0
      %p66 = por %p64, %p65
      %s67 = ssub.s32 %s26, %s38
      %p68 = scmp.eq.s32.totalorder %s67, 0
      %s70 = sadd.s32 %s69, 1
      %s71 = scalar_select %p68, %s69, %s70
      %p74 = pneg %p68
      %p75 = scmp.eq.s32.totalorder %s19, 1
      %p76 = por %p74, %p75
      %p77 = scmp.ne.s32.totalorder %s69, %s72
      %p78 = scmp.eq.s32.totalorder %s19, 0
      %p79 = por %p77, %p78
      %p80 = scmp.ne.s32.totalorder %s69, %s72
      %p81 = scmp.eq.s32.totalorder %s24, 1
      %p82 = por %p80, %p81
      %p83 = scmp.ne.s32.totalorder %s72, %s73
      %p84 = scmp.eq.s32.totalorder %s24, 0
      %p85 = por %p83, %p84
      %p86 = scmp.ne.s32.totalorder %s72, %s73
      %p87 = scmp.eq.s32.totalorder %s25, 1
      %p88 = por %p86, %p87
      %p90 = scmp.ne.s32.totalorder %s73, %s89
      %p91 = scmp.eq.s32.totalorder %s25, 0
      %p92 = por %p90, %p91
      %s94 = sadd.s32 %s93, 1
      %p97 = scmp.eq.s32.totalorder %s19, 1
      %p98 = scmp.ne.s32.totalorder %s93, %s95
      %p99 = scmp.eq.s32.totalorder %s19, 0
      %p100 = por %p98, %p99
      %p101 = scmp.ne.s32.totalorder %s93, %s95
      %p102 = scmp.eq.s32.totalorder %s24, 1
      %p103 = por %p101, %p102
      %p104 = scmp.ne.s32.totalorder %s95, %s96
      %p105 = scmp.eq.s32.totalorder %s24, 0
      %p106 = por %p104, %p105
      %p107 = scmp.ne.s32.totalorder %s95, %s96
      %p108 = scmp.eq.s32.totalorder %s25, 1
      %p109 = por %p107, %p108
      %p111 = scmp.ne.s32.totalorder %s96, %s110
      %p112 = scmp.eq.s32.totalorder %s25, 0
      %p113 = por %p111, %p112
      %s115 = sadd.s32 %s114, 1
      %p118 = scmp.eq.s32.totalorder %s19, 1
      %p119 = scmp.ne.s32.totalorder %s114, %s116
      %p120 = scmp.eq.s32.totalorder %s19, 0
      %p121 = por %p119, %p120
      %p122 = scmp.ne.s32.totalorder %s114, %s116
      %p123 = scmp.eq.s32.totalorder %s24, 1
      %p124 = por %p122, %p123
      %p125 = scmp.ne.s32.totalorder %s116, %s117
      %p126 = scmp.eq.s32.totalorder %s24, 0
      %p127 = por %p125, %p126
      %p128 = scmp.ne.s32.totalorder %s116, %s117
      %p129 = scmp.eq.s32.totalorder %s25, 1
      %p130 = por %p128, %p129
      %p132 = scmp.ne.s32.totalorder %s117, %s131
      %p133 = scmp.eq.s32.totalorder %s25, 0
      %p134 = por %p132, %p133
      %s135 = ssub.s32 %s26, %s38
      %s136 = ssub.s32 %s27, %s34
      %s137 = sor.u32 %s135, %s136
      %p138 = scmp.eq.s32.totalorder %s137, 0
      %s140 = sadd.s32 %s139, 1
      %s141 = scalar_select %p138, %s139, %s140
      %p144 = pneg %p138
      %p145 = scmp.eq.s32.totalorder %s19, 1
      %p146 = por %p144, %p145
      %p147 = scmp.ne.s32.totalorder %s139, %s142
      %p148 = scmp.eq.s32.totalorder %s19, 0
      %p149 = por %p147, %p148
      %p150 = scmp.ne.s32.totalorder %s139, %s142
      %p151 = scmp.eq.s32.totalorder %s24, 1
      %p152 = por %p150, %p151
      %p153 = scmp.ne.s32.totalorder %s142, %s143
      %p154 = scmp.eq.s32.totalorder %s24, 0
      %p155 = por %p153, %p154
      %p156 = scmp.ne.s32.totalorder %s142, %s143
      %p157 = scmp.eq.s32.totalorder %s25, 1
      %p158 = por %p156, %p157
      %p160 = scmp.ne.s32.totalorder %s143, %s159
      %p161 = scmp.eq.s32.totalorder %s25, 0
      %p162 = por %p160, %p161
      %p163 = scmp.le.s32.totalorder 1, %s19
      %p164 = scmp.lt.s32.totalorder %s19, 3
      %p165 = pnand %p163, %p164
      %p166 = pneg %p165
      // Predicated region
      $region9: #{tpu_custom_call.1} parent=5 // pred_check
        _
      $region10: #{tpu_custom_call.1} parent=5 // pred_check_branch
        %168 = sbr.rel (%p165) target = $region12
      $region11: #{tpu_custom_call.1} parent=5 // pred_region
        %s169 = ssub.s32 %s19, 1
        // Predicated region
        $region13: #{tpu_custom_call.1} parent=11 // pred_check
          %p170 = pneg %p106
        $region14: #{tpu_custom_call.1} parent=11 // pred_check_branch
          %172 = sbr.rel (%p170) target = $region16
        $region15: #{tpu_custom_call.1} parent=11 // pred_region
          %s174 = ssub.s32 1024, 1024
          %175 = vsyncadd [#allocation6], %s174
          %s176 = sshll.u32 [#allocation7], 4
          %s177 = int_to_ptr.vmem [resolvable:$true] %s176
          %182 = dma.hbm_to_vmem [thread:$0]  %s2, 1024, %s177, [#allocation6], 128, 128, 8
        $region16: #{tpu_custom_call.1} parent=11 // pred_fallthru
          _
        // Predicated region
        $region17: #{tpu_custom_call.1} parent=11 // pred_check
          %p183 = pneg %p127
        $region18: #{tpu_custom_call.1} parent=11 // pred_check_branch
          %185 = sbr.rel (%p183) target = $region20
        $region19: #{tpu_custom_call.1} parent=11 // pred_region
          _
        $region20: #{tpu_custom_call.1} parent=11 // pred_fallthru
          _
      $region12: #{tpu_custom_call.1} parent=5 // pred_fallthru
        _
      %p186 = scmp.lt.s32.totalorder %s19, 2
      // Predicated region
      $region21: #{tpu_custom_call.1} parent=5 // pred_check
        %p187 = pneg %p186
      $region22: #{tpu_custom_call.1} parent=5 // pred_check_branch
        %189 = sbr.rel (%p187) target = $region24
      $region23: #{tpu_custom_call.1} parent=5 // pred_region
        // Predicated region
        $region25: #{tpu_custom_call.1} parent=23 // pred_check
          %p190 = pneg %p53
        $region26: #{tpu_custom_call.1} parent=23 // pred_check_branch
          %192 = sbr.rel (%p190) target = $region28
        $region27: #{tpu_custom_call.1} parent=23 // pred_region
          %s193 = sand.u32 %s43, 1
          %s194 = scalar_lea.sflag [#allocation3], %s193
          %s195 = sand.u32 %s43, 1
          %s196 = smul.addr %s195, 8
          %s197 = scalar_lea.vmem [#allocation2], %s196
          %s199 = ssub.s32 128, 128
          %200 = vsyncadd %s194, %s199
          %s201 = sadd.s32 %s27, %s26
          %s202 = smul.addr %s201, 128
          %s203 = scalar_lea.hbm %s0, %s202
          %s205 = sshll.u32 %s197, 4
          %s206 = int_to_ptr.vmem [resolvable:$true] %s205
          %208 = dma.hbm_to_vmem [thread:$0]  %s203, 128, %s206, %s194
        $region28: #{tpu_custom_call.1} parent=23 // pred_fallthru
          _
        // Predicated region
        $region29: #{tpu_custom_call.1} parent=23 // pred_check
          %p209 = pneg %p79
        $region30: #{tpu_custom_call.1} parent=23 // pred_check_branch
          %211 = sbr.rel (%p209) target = $region32
        $region31: #{tpu_custom_call.1} parent=23 // pred_region
          %s212 = sand.u32 %s19, 1
          %s213 = scalar_lea.sflag [#allocation6], %s212
          %s214 = sand.u32 %s69, 1
          %s215 = smul.addr %s214, 2
          %s216 = scalar_lea.vmem [#allocation5], %s215
          %s218 = ssub.s32 32, 32
          %219 = vsyncadd %s213, %s218
          %s220 = smul.addr %s26, 32
          %s221 = scalar_lea.hbm %s1, %s220
          %s223 = sshll.u32 %s216, 4
          %s224 = int_to_ptr.vmem [resolvable:$true] %s223
          %226 = dma.hbm_to_vmem [thread:$0]  %s221, 32, %s224, %s213
        $region32: #{tpu_custom_call.1} parent=23 // pred_fallthru
          _
      $region24: #{tpu_custom_call.1} parent=5 // pred_fallthru
        _
      %p227 = scmp.le.s32.totalorder 1, %s19
      %p228 = scmp.lt.s32.totalorder %s19, 3
      %p229 = pnand %p227, %p228
      %p230 = pneg %p229
      // Predicated region
      $region33: #{tpu_custom_call.1} parent=5 // pred_check
        _
      $region34: #{tpu_custom_call.1} parent=5 // pred_check_branch
        %232 = sbr.rel (%p229) target = $region36
      $region35: #{tpu_custom_call.1} parent=5 // pred_region
        %s233 = ssub.s32 %s19, 1
        %s234 = sand.u32 %s46, 1
        %s235 = scalar_lea.sflag [#allocation3], %s234
        %s236 = sand.u32 %s46, 1
        %s237 = smul.addr %s236, 8
        %s238 = scalar_lea.vmem [#allocation2], %s237
        // Predicated region
        $region37: #{tpu_custom_call.1} parent=35 // pred_check
          %p239 = pneg %p59
        $region38: #{tpu_custom_call.1} parent=35 // pred_check_branch
          %241 = sbr.rel (%p239) target = $region40
        $region39: #{tpu_custom_call.1} parent=35 // pred_region
          %242 = dma.done %s235, 128
        $region40: #{tpu_custom_call.1} parent=35 // pred_fallthru
          _
        %s243 = sand.u32 %s24, 1
        %s244 = scalar_lea.sflag [#allocation6], %s243
        %s245 = sand.u32 %s72, 1
        %s246 = smul.addr %s245, 2
        %s247 = scalar_lea.vmem [#allocation5], %s246
        // Predicated region
        $region41: #{tpu_custom_call.1} parent=35 // pred_check
          %p248 = pneg %p85
        $region42: #{tpu_custom_call.1} parent=35 // pred_check_branch
          %250 = sbr.rel (%p248) target = $region44
        $region43: #{tpu_custom_call.1} parent=35 // pred_region
          %251 = dma.done %s244, 32
        $region44: #{tpu_custom_call.1} parent=35 // pred_fallthru
          _
        // Predicated region
        $region45: #{tpu_custom_call.1} parent=35 // pred_check
          %p252 = pneg %p106
        $region46: #{tpu_custom_call.1} parent=35 // pred_check_branch
          %254 = sbr.rel (%p252) target = $region48
        $region47: #{tpu_custom_call.1} parent=35 // pred_region
          %255 = dma.done [#allocation6], 1024
        $region48: #{tpu_custom_call.1} parent=35 // pred_fallthru
          _
        %s256 = sand.u32 %s46, 1
        %s257 = scalar_lea.sflag [#allocation3], %s256
        %s258 = sand.u32 %s46, 1
        %s259 = smul.addr %s258, 8
        %s260 = scalar_lea.vmem [#allocation2], %s259
        %p261 = pneg %p59
        %p262 = pneg %p56
        %s263 = sand.u32 %s24, 1
        %s264 = scalar_lea.sflag [#allocation6], %s263
        %s265 = sand.u32 %s72, 1
        %s266 = smul.addr %s265, 2
        %s267 = scalar_lea.vmem [#allocation5], %s266
        %p268 = pneg %p85
        %p269 = pneg %p82
        %p270 = pneg %p106
        %p271 = pneg %p103
        %p272 = pneg %p127
        %p273 = pneg %p124
        %p274 = pneg %p155
        %p275 = pneg %p152
        %s276 = sand.u32 %s142, 1
        %s277 = scalar_lea.sflag [#allocation4], %s276
        %s278 = sand.u32 %s142, 1
        %s279 = smul.addr %s278, 8
        %s280 = scalar_lea.vmem [#allocation8], %s279
        %v281 = vld [vmem:[%s238] sm:$0xff]
        %vm282 = vcmask 261120
        %v283 = vsel %vm282, %v281, 0.0
        %284 = vadd.xlane.f32.xlu0 %v283
        %v285 = vpop.xlane.xlu0 %284
        %v286 = vrcp.pop 32.0
        %v287 = vmul.f32 %v285, %v286
        %v288 = vsub.f32 %v281, %v287
        %v289 = vmul.f32 %v288, %v288
        %v290 = vsel %vm282, %v289, 0.0
        %291 = vadd.xlane.f32.xlu0 %v290
        %v292 = vpop.xlane.xlu0 %291
        %v293 = vmul.f32 %v292, %v286
        %v294 = vadd.f32 %v293, 1e-06
        %v295 = vrsqrt.pop %v294
        %v296 = vmul.f32 %v288, %v295
        %298 = vrot.lane.b32.xlu0 %v281, 96
        %v299 = vpop.permute.xlu0 %298
        %v301 = vsel %vm282, %v299, 0.0
        %302 = vadd.xlane.f32.xlu0 %v301
        %v303 = vpop.xlane.xlu0 %302
        %v304 = vmul.f32 %v303, %v286
        %v305 = vsub.f32 %v281, %v304
        %v306 = vmul.f32 %v305, %v305
        %308 = vrot.lane.b32.xlu0 %v306, 96
        %v309 = vpop.permute.xlu0 %308
        %v311 = vsel %vm282, %v309, 0.0
        %312 = vadd.xlane.f32.xlu0 %v311
        %v313 = vpop.xlane.xlu0 %312
        %v314 = vmul.f32 %v313, %v286
        %v315 = vadd.f32 %v314, 1e-06
        %v316 = vrsqrt.pop %v315
        %v317 = vmul.f32 %v305, %v316
        %v318 = vsel %vm282, %v296, %v317
        %v319 = vld [vmem:[%s247 + $0x1] sm:$0x1]
        %v320 = vlaneseq
        %v321 = vshrl.u32 %v320, 7
        %v322 = vsub.s32 0, %v321
        %v323 = vrot.slane %v319, %v322
        %v324 = vmul.f32 %v318, %v323
        %v325 = vld [vmem:[%s247] sm:$0x1]
        %v326 = vlaneseq
        %v327 = vshrl.u32 %v326, 7
        %v328 = vsub.s32 0, %v327
        %v329 = vrot.slane %v325, %v328
        %v330 = vadd.f32 %v324, %v329
        %v331 = vld [vmem:[#allocation7] sm:$0xff]
        %v332 = vld [vmem:[#allocation7 + $0x8] sm:$0xff]
        %v333 = vld [vmem:[#allocation7 + $0x10] sm:$0xff]
        %v334 = vld [vmem:[#allocation7 + $0x18] sm:$0xff]
        %v335 = vld [vmem:[#allocation7 + $0x20] sm:$0xff]
        %v336 = vld [vmem:[#allocation7 + $0x28] sm:$0xff]
        %v337 = vld [vmem:[#allocation7 + $0x30] sm:$0xff]
        %v338 = vld [vmem:[#allocation7 + $0x38] sm:$0xff]
        %v339 = vld [vmem:[%s3] sm:$0x1]
        %v341 = vlaneseq
        %v342 = vshrl.u32 %v341, 7
        %v343 = vsub.s32 0, %v342
        %v344 = vrot.slane %v339, %v343
        %vm346 = vcmask 523264
        %v348 = vsel %vm346, %v330, 0
        %350 = vmatprep.subr.mxu0 0.0
        %351 = vmatpush1.msra.mxu0 %v331
        %352 = vmatprep.subr.mxu0 0.0
        %353 = vmatpush1.msra.mxu0 %v332
        %354 = vmatprep.subr.mxu0 0.0
        %355 = vmatpush1.msra.mxu0 %v333
        %356 = vmatprep.subr.mxu0 0.0
        %357 = vmatpush1.msra.mxu0 %v334
        %358 = vmatprep.subr.mxu0 0.0
        %359 = vmatpush1.msra.mxu0 %v335
        %360 = vmatprep.subr.mxu0 0.0
        %361 = vmatpush1.msra.mxu0 %v336
        %362 = vmatprep.subr.mxu0 0.0
        %363 = vmatpush1.msra.mxu0 %v337
        %364 = vmatprep.subr.mxu0 0.0
        %365 = vmatpush1.msra.mxu0 %v338
        %366 = vmatprep.subr.mxu0 0.0
        %367 = vmatpush1.msra.mxu0 0.0
        %368 = vmatprep.subr.mxu0 0.0
        %369 = vmatpush1.msra.mxu0 0.0
        %370 = vmatprep.subr.mxu0 0.0
        %371 = vmatpush1.msra.mxu0 0.0
        %372 = vmatprep.subr.mxu0 0.0
        %373 = vmatpush1.msra.mxu0 0.0
        %374 = vmatprep.subr.mxu0 0.0
        %375 = vmatpush1.msra.mxu0 0.0
        %376 = vmatprep.subr.mxu0 0.0
        %377 = vmatpush1.msra.mxu0 0.0
        %378 = vmatprep.subr.mxu0 0.0
        %379 = vmatpush1.msra.mxu0 0.0
        %380 = vmatprep.subr.mxu0 0.0
        %381 = vmatpush1.msra.mxu0 0.0
        %382 = vmatprep.subr.mxu0 0.0
        %383 = vmatpush1.msra.mxu0 0.0
        %384 = vmatprep.subr.mxu0 0.0
        %385 = vmatpush1.msra.mxu0 0.0
        %386 = vmatprep.subr.mxu0 0.0
        %387 = vmatpush1.msra.mxu0 0.0
        %388 = vmatprep.subr.mxu0 0.0
        %389 = vmatpush1.msra.mxu0 0.0
        %390 = vmatprep.subr.mxu0 0.0
        %391 = vmatpush1.msra.mxu0 0.0
        %392 = vmatprep.subr.mxu0 0.0
        %393 = vmatpush1.msra.mxu0 0.0
        %394 = vmatprep.subr.mxu0 0.0
        %395 = vmatpush1.msra.mxu0 0.0
        %396 = vmatprep.subr.mxu0 0.0
        %397 = vmatpush1.msra.mxu0 0.0
        %398 = vmatprep.subr.mxu0 0.0
        %399 = vmatpush1.msra.mxu0 0.0
        %400 = vmatprep.subr.mxu0 0.0
        %401 = vmatpush1.msra.mxu0 0.0
        %402 = vmatprep.subr.mxu0 0.0
        %403 = vmatpush1.msra.mxu0 0.0
        %404 = vmatprep.subr.mxu0 0.0
        %405 = vmatpush1.msra.mxu0 0.0
        %406 = vmatprep.subr.mxu0 0.0
        %407 = vmatpush1.msra.mxu0 0.0
        %408 = vmatprep.subr.mxu0 0.0
        %409 = vmatpush1.msra.mxu0 0.0
        %410 = vmatprep.subr.mxu0 0.0
        %411 = vmatpush1.msra.mxu0 0.0
        %412 = vmatprep.subr.mxu0 0.0
        %413 = vmatpush1.msra.mxu0 0.0
        %414 = vmatprep.mubr.f32.mxu0 0.0
        %415 = vmatmul.mubr.f32.gmra.mrb[0].mxu0 %v348
        %v416 = vpop.f32.mrb[0].mxu0
        %v417 = vadd.f32 %v344, %v416
        %v418 = vpop.f32.mrb[0].mxu0
        %419 = vdwg.mxu0
        %420 = vst [vmem:[%s280] sm:$0xff] %v417
        %s421 = sand.u32 %s142, 1
        %s422 = scalar_lea.sflag [#allocation4], %s421
        %s423 = sand.u32 %s142, 1
        %s424 = smul.addr %s423, 8
        %s425 = scalar_lea.vmem [#allocation8], %s424
        // Predicated region
        $region49: #{tpu_custom_call.1} parent=35 // pred_check
          %p426 = pneg %p152
        $region50: #{tpu_custom_call.1} parent=35 // pred_check_branch
          %428 = sbr.rel (%p426) target = $region52
        $region51: #{tpu_custom_call.1} parent=35 // pred_region
          %s430 = ssub.s32 128, 128
          %431 = vsyncadd %s422, %s430
          %s432 = sadd.s32 %s29, %s28
          %s433 = smul.addr %s432, 128
          %s434 = scalar_lea.hbm %s4, %s433
          %s436 = sshll.u32 %s425, 4
          %s437 = int_to_ptr.vmem [resolvable:$true] %s436
          %439 = dma.vmem_to_hbm [thread:$0]  %s437, 128, %s434, %s422
        $region52: #{tpu_custom_call.1} parent=35 // pred_fallthru
          _
      $region36: #{tpu_custom_call.1} parent=5 // pred_fallthru
        _
      %p440 = scmp.le.s32.totalorder 2, %s19
      // Predicated region
      $region53: #{tpu_custom_call.1} parent=5 // pred_check
        %p441 = pneg %p440
      $region54: #{tpu_custom_call.1} parent=5 // pred_check_branch
        %443 = sbr.rel (%p441) target = $region56
      $region55: #{tpu_custom_call.1} parent=5 // pred_region
        %s444 = ssub.s32 %s19, 2
        // Predicated region
        $region57: #{tpu_custom_call.1} parent=55 // pred_check
          %p445 = pneg %p158
        $region58: #{tpu_custom_call.1} parent=55 // pred_check_branch
          %447 = sbr.rel (%p445) target = $region60
        $region59: #{tpu_custom_call.1} parent=55 // pred_region
          %s448 = sand.u32 %s143, 1
          %s449 = scalar_lea.sflag [#allocation4], %s448
          %s450 = sand.u32 %s143, 1
          %s451 = smul.addr %s450, 8
          %s452 = scalar_lea.vmem [#allocation8], %s451
          %453 = dma.done %s449, 128
        $region60: #{tpu_custom_call.1} parent=55 // pred_fallthru
          _
      $region56: #{tpu_custom_call.1} parent=5 // pred_fallthru
        _
    $region6: #{tpu_custom_call.1} parent=1 // loop_footer
      %s23 = sadd.s32 1, %s19
    $region7: #{tpu_custom_call.1} parent=1 // loop_footer_branch
      %18 = sbr.rel target = $region3
    $region8: #{tpu_custom_call.1} parent=1 // loop_exit
      _
    %454 = vsyncpa [#allocation3], 1
    %s455 = scalar_lea.sflag [#allocation3], 1
    %456 = vsyncpa %s455, 1
    %457 = vsyncpa [#allocation6], 1
    %s458 = scalar_lea.sflag [#allocation6], 1
    %459 = vsyncpa %s458, 1
    %460 = vsyncpa [#allocation4], 1
    %s461 = scalar_lea.sflag [#allocation4], 1
    %462 = vsyncpa %s461, 1

</llo_original>
